<compile_context>
chip_gen: v5e
topology: v5e:2x2
jax: 0.10.0
libtpu: 0.0.40
codegen_flags: <defaults>
</compile_context>

<pallas_src>
import functools

import jax
import jax.numpy as jnp
from jax.experimental import pallas as pl
from jax.experimental.pallas import tpu as pltpu

HIDDEN = 16                      # fc1/fc2 width (fixed by the PyTorch module)
_LANE = 128
_TB_MAX = 32768                  # max batch-tile (lane) width per grid step
_X_BLOCK_TARGET_BYTES = 2 * 1024 * 1024   # target size of one x tile in VMEM
_VMEM_LIMIT_BYTES = 32 * 1024 * 1024      # explicit scoped-VMEM limit
_PALLAS_MIN_BATCH = 512          # below this, plain XLA beats launch/DMA cost


def _round_up(x, m):
    return ((x + m - 1) // m) * m


def _choose_tiling(batch, state_dim):
    """Pick (tb, n_blocks, b_pad): lane-tile width, grid size, padded batch."""
    b128 = _round_up(max(batch, 1), _LANE)
    # Cap each x tile at ~_X_BLOCK_TARGET_BYTES so large state_dim still fits
    # comfortably in VMEM with double buffering.
    cap = (_X_BLOCK_TARGET_BYTES // (4 * state_dim)) // _LANE * _LANE
    cap = max(_LANE, min(_TB_MAX, cap))
    # >=2 grid steps when there is enough work: the "parallel" batch axis is
    # then split across both v7x TensorCores (one extra ~0.35us step on
    # single-TC v5e/v6e, which is noise).
    min_blocks = 2 if b128 >= 2 * _LANE else 1
    n_blocks = max(pl.cdiv(b128, cap), min_blocks)
    tb = _round_up(pl.cdiv(b128, n_blocks), _LANE)
    b_pad = n_blocks * tb
    return tb, n_blocks, b_pad


def _qnet_kernel(w1_ref, b1_ref, w2_ref, b2_ref, w3_ref, b3_ref, x_ref, out_ref):
    """One batch tile: x (TB, S) -> out (A, TB), batch on the 128-lane axis."""
    x = x_ref[...]                                   # (TB, S) — natural HBM layout
    # Minor-dim contraction (transposed-rhs matmul) re-orients x on-chip:
    # h1[h, b] = sum_s w1[h, s] * x[b, s].
    h1 = jnp.einsum("hs,bs->hb", w1_ref[...], x,
                    preferred_element_type=jnp.float32) + b1_ref[...]
    h1 = jnp.maximum(h1, 0.0)                        # (16, TB)
    h2 = jnp.dot(w2_ref[...], h1,
                 preferred_element_type=jnp.float32) + b2_ref[...]
    h2 = jnp.maximum(h2, 0.0)                        # (16, TB)
    out = jnp.dot(w3_ref[...], h2,
                  preferred_element_type=jnp.float32) + b3_ref[...]
    # NOTE: padded batch columns (beyond the true batch) carry relu(b)-style
    # garbage; they are sliced off in the wrapper.  Never reduce over the
    # batch/lane axis inside this kernel.
    out_ref[...] = out.astype(out_ref.dtype)         # (A, TB) lane-dense store


def _qnet_pallas_impl(state, params, actions_major):
    w1, b1, w2, b2, w3, b3 = params
    batch, state_dim = state.shape
    action_num = w3.shape[0]

    tb, n_blocks, b_pad = _choose_tiling(batch, state_dim)

    x = state.astype(jnp.float32)
    if b_pad != batch:
        # Single fused copy under jit; no-op when batch is tile-aligned.
        x = jnp.pad(x, ((0, b_pad - batch), (0, 0)))

    b1c = b1.reshape(HIDDEN, 1).astype(jnp.float32)
    b2c = b2.reshape(HIDDEN, 1).astype(jnp.float32)
    b3c = b3.reshape(action_num, 1).astype(jnp.float32)

    const = lambda i: (0, 0)   # params: DMA'd once, VMEM-resident across steps

    out_t = pl.pallas_call(
        _qnet_kernel,
        out_shape=jax.ShapeDtypeStruct((action_num, b_pad), jnp.float32),
        grid=(n_blocks,),
        in_specs=[
            pl.BlockSpec((HIDDEN, state_dim), const),      # w1
            pl.BlockSpec((HIDDEN, 1), const),              # b1
            pl.BlockSpec((HIDDEN, HIDDEN), const),         # w2
            pl.BlockSpec((HIDDEN, 1), const),              # b2
            pl.BlockSpec((action_num, HIDDEN), const),     # w3
            pl.BlockSpec((action_num, 1), const),          # b3
            pl.BlockSpec((tb, state_dim), lambda i: (i, 0)),  # x tile (contiguous)
        ],
        out_specs=pl.BlockSpec((action_num, tb), lambda i: (0, i)),
        compiler_params=pltpu.CompilerParams(
            dimension_semantics=("parallel",),
            vmem_limit_bytes=_VMEM_LIMIT_BYTES),
    )(w1.astype(jnp.float32), b1c, w2.astype(jnp.float32), b2c,
      w3.astype(jnp.float32), b3c, x)

    if b_pad != batch:
        out_t = out_t[:, :batch]
    if actions_major:
        return out_t            # (A, batch): no post-processing at all
    return out_t.T              # (batch, A): PyTorch semantics (fused under jit)


_qnet_pallas_jit = jax.jit(_qnet_pallas_impl, static_argnums=(2,))


def qnet_forward_pallas(state, params):
    """Pallas forward, (batch, state_dim) -> (batch, action_num)."""
    return _qnet_pallas_jit(state, params, False)


def qnet_forward_pallas_actions_major(state, params):
    """Pallas forward returning (action_num, batch) with zero post-processing."""
    return _qnet_pallas_jit(state, params, True)


@jax.jit
def qnet_reference(state, params):
    """Plain XLA reference (also the fast path for tiny batches)."""
    w1, b1, w2, b2, w3, b3 = params
    h1 = jnp.maximum(state @ w1.T + b1, 0.0)
    h2 = jnp.maximum(h1 @ w2.T + b2, 0.0)
    return h2 @ w3.T + b3


def qnet_forward(state, params):
    """Dispatcher: tiny batches go to the fused XLA dot chain (pallas launch/
    DMA overhead dominates there); large batches use the Pallas kernel."""
    if state.shape[0] < _PALLAS_MIN_BATCH:
        return qnet_reference(state, params)
    return qnet_forward_pallas(state, params)


def init_qnet_params(key, state_dim, action_num):
    """PyTorch default nn.Linear init, weights in (out_features, in_features)."""
    def linear(k, fan_in, fan_out):
        kw, kb = jax.random.split(k)
        bound = 1.0 / jnp.sqrt(float(fan_in))
        w = jax.random.uniform(kw, (fan_out, fan_in), jnp.float32, -bound, bound)
        b = jax.random.uniform(kb, (fan_out,), jnp.float32, -bound, bound)
        return w, b

    k1, k2, k3 = jax.random.split(key, 3)
    w1, b1 = linear(k1, state_dim, HIDDEN)
    w2, b2 = linear(k2, HIDDEN, HIDDEN)
    w3, b3 = linear(k3, HIDDEN, action_num)
    return (w1, b1, w2, b2, w3, b3)


if __name__ == "__main__":
    key = jax.random.PRNGKey(0)
    k_x, k_p, k_x2 = jax.random.split(key, 3)

    batch, state_dim, action_num = 8, 4, 2
    state = jax.random.normal(k_x, (batch, state_dim), jnp.float32)
    params = init_qnet_params(k_p, state_dim, action_num)

    # Force the Pallas path (the dispatcher would route batch=8 to plain XLA).
    out = qnet_forward_pallas(state, params)
    jax.block_until_ready(out)
    ref = qnet_reference(state, params)
    assert out.shape == (batch, action_num)
    assert jnp.allclose(out, ref, atol=1e-5, rtol=1e-5)

    # Exercise the padded, multi-block grid path (2500 -> 2 blocks of tb=1280).
    big_batch = 2500
    state_big = jax.random.normal(k_x2, (big_batch, state_dim), jnp.float32)
    out_big = qnet_forward_pallas(state_big, params)
    jax.block_until_ready(out_big)
    ref_big = qnet_reference(state_big, params)
    assert out_big.shape == (big_batch, action_num)
    assert jnp.allclose(out_big, ref_big, atol=1e-4, rtol=1e-4)

    # Actions-major output (no wrapper-side un-transpose at all).
    out_am = qnet_forward_pallas_actions_major(state_big, params)
    jax.block_until_ready(out_am)
    assert out_am.shape == (action_num, big_batch)
    assert jnp.allclose(out_am, ref_big.T, atol=1e-4, rtol=1e-4)

    print("KERNEL_OK")
</pallas_src>

<mosaic_0001>
module attributes {stable_mosaic.version = 11 : i64} {
  func.func @_qnet_kernel(%arg0: i32, %arg1: memref<16x4xf32, #tpu.memory_space<vmem>>, %arg2: memref<16x1xf32, #tpu.memory_space<vmem>>, %arg3: memref<16x16xf32, #tpu.memory_space<vmem>>, %arg4: memref<16x1xf32, #tpu.memory_space<vmem>>, %arg5: memref<2x16xf32, #tpu.memory_space<vmem>>, %arg6: memref<2x1xf32, #tpu.memory_space<vmem>>, %arg7: memref<128x4xf32, #tpu.memory_space<vmem>>, %arg8: memref<2x128xf32, #tpu.memory_space<vmem>>) attributes {dimension_semantics = [#tpu.dimension_semantics<parallel>], iteration_bounds = array<i64: 1>, scalar_prefetch = 0 : i64, scratch_operands = 0 : i64, tpu.core_type = #tpu.core_type<tc>, window_params = [{pipeline_mode = #tpu.pipeline_mode<synchronous>, transform_indices = @transform_0, window_bounds = array<i64: 16, 4>}, {pipeline_mode = #tpu.pipeline_mode<synchronous>, transform_indices = @transform_1, window_bounds = array<i64: 16, 1>}, {pipeline_mode = #tpu.pipeline_mode<synchronous>, transform_indices = @transform_2, window_bounds = array<i64: 16, 16>}, {pipeline_mode = #tpu.pipeline_mode<synchronous>, transform_indices = @transform_3, window_bounds = array<i64: 16, 1>}, {pipeline_mode = #tpu.pipeline_mode<synchronous>, transform_indices = @transform_4, window_bounds = array<i64: 2, 16>}, {pipeline_mode = #tpu.pipeline_mode<synchronous>, transform_indices = @transform_5, window_bounds = array<i64: 2, 1>}, {transform_indices = @transform_6, window_bounds = array<i64: 128, 4>}, {transform_indices = @transform_7, window_bounds = array<i64: 2, 128>}]} {
    %c0 = arith.constant 0 : index
    %c0_0 = arith.constant 0 : index
    %0 = vector.load %arg7[%c0, %c0_0] : memref<128x4xf32, #tpu.memory_space<vmem>>, vector<128x4xf32>
    %c0_1 = arith.constant 0 : index
    %c0_2 = arith.constant 0 : index
    %1 = vector.load %arg1[%c0_1, %c0_2] : memref<16x4xf32, #tpu.memory_space<vmem>>, vector<16x4xf32>
    "tpu.trace_start"() <{level = 10 : i32, message = "hs,bs->hb"}> : () -> ()
    %cst = arith.constant dense<0.000000e+00> : vector<16x128xf32>
    %2 = tpu.matmul %1, %0, %cst {dimension_numbers = #tpu.dot_dimension_numbers<[1], [1], [0], [0], [0, 0, 1, 0], [], []>} : vector<16x4xf32>, vector<128x4xf32>, vector<16x128xf32> -> vector<16x128xf32>
    "tpu.trace_stop"() : () -> ()
    %c0_3 = arith.constant 0 : index
    %c0_4 = arith.constant 0 : index
    %3 = vector.load %arg2[%c0_3, %c0_4] : memref<16x1xf32, #tpu.memory_space<vmem>>, vector<16x1xf32>
    %4 = vector.broadcast %3 : vector<16x1xf32> to vector<16x128xf32>
    %5 = arith.addf %2, %4 : vector<16x128xf32>
    %cst_5 = arith.constant 0.000000e+00 : f32
    %6 = vector.broadcast %cst_5 : f32 to vector<16x128xf32>
    %7 = arith.maximumf %5, %6 : vector<16x128xf32>
    %c0_6 = arith.constant 0 : index
    %c0_7 = arith.constant 0 : index
    %8 = vector.load %arg3[%c0_6, %c0_7] : memref<16x16xf32, #tpu.memory_space<vmem>>, vector<16x16xf32>
    %cst_8 = arith.constant dense<0.000000e+00> : vector<16x128xf32>
    %9 = tpu.matmul %8, %7, %cst_8 {dimension_numbers = #tpu.dot_dimension_numbers<[1], [0], [0], [1], [0, 0, 1, 1], [], []>} : vector<16x16xf32>, vector<16x128xf32>, vector<16x128xf32> -> vector<16x128xf32>
    %c0_9 = arith.constant 0 : index
    %c0_10 = arith.constant 0 : index
    %10 = vector.load %arg4[%c0_9, %c0_10] : memref<16x1xf32, #tpu.memory_space<vmem>>, vector<16x1xf32>
    %11 = vector.broadcast %10 : vector<16x1xf32> to vector<16x128xf32>
    %12 = arith.addf %9, %11 : vector<16x128xf32>
    %cst_11 = arith.constant 0.000000e+00 : f32
    %13 = vector.broadcast %cst_11 : f32 to vector<16x128xf32>
    %14 = arith.maximumf %12, %13 : vector<16x128xf32>
    %c0_12 = arith.constant 0 : index
    %c0_13 = arith.constant 0 : index
    %15 = vector.load %arg5[%c0_12, %c0_13] : memref<2x16xf32, #tpu.memory_space<vmem>>, vector<2x16xf32>
    %cst_14 = arith.constant dense<0.000000e+00> : vector<2x128xf32>
    %16 = tpu.matmul %15, %14, %cst_14 {dimension_numbers = #tpu.dot_dimension_numbers<[1], [0], [0], [1], [0, 0, 1, 1], [], []>} : vector<2x16xf32>, vector<16x128xf32>, vector<2x128xf32> -> vector<2x128xf32>
    %c0_15 = arith.constant 0 : index
    %c0_16 = arith.constant 0 : index
    %17 = vector.load %arg6[%c0_15, %c0_16] : memref<2x1xf32, #tpu.memory_space<vmem>>, vector<2x1xf32>
    %18 = vector.broadcast %17 : vector<2x1xf32> to vector<2x128xf32>
    %19 = arith.addf %16, %18 : vector<2x128xf32>
    %c0_17 = arith.constant 0 : index
    %c0_18 = arith.constant 0 : index
    %20 = vector.load %arg8[%c0_17, %c0_18] : memref<2x128xf32, #tpu.memory_space<vmem>>, vector<2x128xf32>
    tpu.vector_store %arg8[%c0_17, %c0_18], %19 {strides = array<i32>} : memref<2x128xf32, #tpu.memory_space<vmem>>, vector<2x128xf32>,
    return
  }
  func.func @transform_0(%arg0: i32) -> (i32, i32) {
    %c0_i32 = arith.constant 0 : i32
    %c0_i32_0 = arith.constant 0 : i32
    %c0_i32_1 = arith.constant 0 : i32
    return %c0_i32, %c0_i32_0 : i32, i32
  }
  func.func @transform_1(%arg0: i32) -> (i32, i32) {
    %c0_i32 = arith.constant 0 : i32
    %c0_i32_0 = arith.constant 0 : i32
    %c0_i32_1 = arith.constant 0 : i32
    return %c0_i32, %c0_i32_0 : i32, i32
  }
  func.func @transform_2(%arg0: i32) -> (i32, i32) {
    %c0_i32 = arith.constant 0 : i32
    %c0_i32_0 = arith.constant 0 : i32
    %c0_i32_1 = arith.constant 0 : i32
    return %c0_i32, %c0_i32_0 : i32, i32
  }
  func.func @transform_3(%arg0: i32) -> (i32, i32) {
    %c0_i32 = arith.constant 0 : i32
    %c0_i32_0 = arith.constant 0 : i32
    %c0_i32_1 = arith.constant 0 : i32
    return %c0_i32, %c0_i32_0 : i32, i32
  }
  func.func @transform_4(%arg0: i32) -> (i32, i32) {
    %c0_i32 = arith.constant 0 : i32
    %c0_i32_0 = arith.constant 0 : i32
    %c0_i32_1 = arith.constant 0 : i32
    return %c0_i32, %c0_i32_0 : i32, i32
  }
  func.func @transform_5(%arg0: i32) -> (i32, i32) {
    %c0_i32 = arith.constant 0 : i32
    %c0_i32_0 = arith.constant 0 : i32
    %c0_i32_1 = arith.constant 0 : i32
    return %c0_i32, %c0_i32_0 : i32, i32
  }
  func.func @transform_6(%arg0: i32) -> (i32, i32) {
    %c0_i32 = arith.constant 0 : i32
    %c0_i32_0 = arith.constant 0 : i32
    return %arg0, %c0_i32 : i32, i32
  }
  func.func @transform_7(%arg0: i32) -> (i32, i32) {
    %c0_i32 = arith.constant 0 : i32
    %c0_i32_0 = arith.constant 0 : i32
    return %c0_i32, %arg0 : i32, i32
  }
}

</mosaic_0001>

<llo_original>
// kernel: _qnet_pallas_impl.1
$region0: #{_qnet_pallas_impl.1}
  #allocation0 [shape = 'u32[]', space=smem, size = 0x4, offset = 0x4, fixed_abs, tag = 'smem constant byte address 0x4 - core index']
  #allocation1 [shape = 'u32[72,128]{1,0:T(1,128)}', space=vmem, size = 0x9000, scoped, tag = 'internal scratch']
  %s0 = inlined_call_operand.vmem [shape: f32[16,4], index: 0, kind: input, shape index: {}]
  %s1 = inlined_call_operand.vmem [shape: f32[16,1], index: 1, kind: input, shape index: {}]
  %s2 = inlined_call_operand.vmem [shape: f32[16,16], index: 2, kind: input, shape index: {}]
  %s3 = inlined_call_operand.vmem [shape: f32[16,1], index: 3, kind: input, shape index: {}]
  %s4 = inlined_call_operand.vmem [shape: f32[2,16], index: 4, kind: input, shape index: {}]
  %s5 = inlined_call_operand.vmem [shape: f32[2,1], index: 5, kind: input, shape index: {}]
  %s6 = inlined_call_operand.vmem [shape: f32[128,4], index: 6, kind: input, shape index: {}]
  %s7 = inlined_call_operand.vmem [shape: f32[2,128], index: 7, kind: output, shape index: {}]
  %s8 = sld [smem:[#allocation0]]
  $region38: #{_qnet_pallas_impl.1} parent=0
    _
  %s10 = ssub.s32 1, %s8
  %s11 = scalar_select 0, %s10, %s8
  // Predicated region
  $region2: #{_qnet_pallas_impl.1} parent=0 // pred_check
    _
  $region3: #{_qnet_pallas_impl.1} parent=0 // pred_check_branch
    %13 = sbr.rel (0) target = $region5
  $region4: #{_qnet_pallas_impl.1} parent=0 // pred_region
    _
  $region5: #{_qnet_pallas_impl.1} parent=0 // pred_fallthru
    _
  // Predicated region
  $region6: #{_qnet_pallas_impl.1} parent=0 // pred_check
    _
  $region7: #{_qnet_pallas_impl.1} parent=0 // pred_check_branch
    %15 = sbr.rel (0) target = $region9
  $region8: #{_qnet_pallas_impl.1} parent=0 // pred_region
    _
  $region9: #{_qnet_pallas_impl.1} parent=0 // pred_fallthru
    _
  // Predicated region
  $region10: #{_qnet_pallas_impl.1} parent=0 // pred_check
    _
  $region11: #{_qnet_pallas_impl.1} parent=0 // pred_check_branch
    %17 = sbr.rel (0) target = $region13
  $region12: #{_qnet_pallas_impl.1} parent=0 // pred_region
    _
  $region13: #{_qnet_pallas_impl.1} parent=0 // pred_fallthru
    _
  // Predicated region
  $region14: #{_qnet_pallas_impl.1} parent=0 // pred_check
    _
  $region15: #{_qnet_pallas_impl.1} parent=0 // pred_check_branch
    %19 = sbr.rel (0) target = $region17
  $region16: #{_qnet_pallas_impl.1} parent=0 // pred_region
    _
  $region17: #{_qnet_pallas_impl.1} parent=0 // pred_fallthru
    _
  // Predicated region
  $region18: #{_qnet_pallas_impl.1} parent=0 // pred_check
    _
  $region19: #{_qnet_pallas_impl.1} parent=0 // pred_check_branch
    %21 = sbr.rel (0) target = $region21
  $region20: #{_qnet_pallas_impl.1} parent=0 // pred_region
    _
  $region21: #{_qnet_pallas_impl.1} parent=0 // pred_fallthru
    _
  // Predicated region
  $region22: #{_qnet_pallas_impl.1} parent=0 // pred_check
    _
  $region23: #{_qnet_pallas_impl.1} parent=0 // pred_check_branch
    %23 = sbr.rel (0) target = $region25
  $region24: #{_qnet_pallas_impl.1} parent=0 // pred_region
    _
  $region25: #{_qnet_pallas_impl.1} parent=0 // pred_fallthru
    _
  // Predicated region
  $region26: #{_qnet_pallas_impl.1} parent=0 // pred_check
    _
  $region27: #{_qnet_pallas_impl.1} parent=0 // pred_check_branch
    %25 = sbr.rel (0) target = $region29
  $region28: #{_qnet_pallas_impl.1} parent=0 // pred_region
    _
  $region29: #{_qnet_pallas_impl.1} parent=0 // pred_fallthru
    _
  %v26 = vld [vmem:[%s6] sm:$0xff]
  %v27 = vld [vmem:[%s6 + $0x8] sm:$0xff]
  %v28 = vld [vmem:[%s6 + $0x10] sm:$0xff]
  %v29 = vld [vmem:[%s6 + $0x18] sm:$0xff]
  %v30 = vld [vmem:[%s6 + $0x20] sm:$0xff]
  %v31 = vld [vmem:[%s6 + $0x28] sm:$0xff]
  %v32 = vld [vmem:[%s6 + $0x30] sm:$0xff]
  %v33 = vld [vmem:[%s6 + $0x38] sm:$0xff]
  %v34 = vld [vmem:[%s6 + $0x40] sm:$0xff]
  %v35 = vld [vmem:[%s6 + $0x48] sm:$0xff]
  %v36 = vld [vmem:[%s6 + $0x50] sm:$0xff]
  %v37 = vld [vmem:[%s6 + $0x58] sm:$0xff]
  %v38 = vld [vmem:[%s6 + $0x60] sm:$0xff]
  %v39 = vld [vmem:[%s6 + $0x68] sm:$0xff]
  %v40 = vld [vmem:[%s6 + $0x70] sm:$0xff]
  %v41 = vld [vmem:[%s6 + $0x78] sm:$0xff]
  %v42 = vld [vmem:[%s0] sm:$0xff]
  %v43 = vld [vmem:[%s0 + $0x8] sm:$0xff]
  %v44 = vld [vmem:[%s1] sm:$0xff]
  %v45 = vld [vmem:[%s1 + $0x8] sm:$0xff]
  %47 = vset.pattern.permute.xlu0 0
  %48 = vperm.xlu0 %47, %v44
  %v49 = vpop.permute.xlu0 %48
  %52 = vset.pattern.permute.xlu0 0
  %53 = vperm.xlu0 %52, %v45
  %v54 = vpop.permute.xlu0 %53
  %vm56 = vcmask 31744
  %v58 = vsel %vm56, %v42, 0
  %v61 = vsel %vm56, %v43, 0
  %v64 = vsel %vm56, %v26, 0
  %v67 = vsel %vm56, %v27, 0
  %v70 = vsel %vm56, %v28, 0
  %v73 = vsel %vm56, %v29, 0
  %v76 = vsel %vm56, %v30, 0
  %v79 = vsel %vm56, %v31, 0
  %v82 = vsel %vm56, %v32, 0
  %v85 = vsel %vm56, %v33, 0
  %v88 = vsel %vm56, %v34, 0
  %v91 = vsel %vm56, %v35, 0
  %v94 = vsel %vm56, %v36, 0
  %v97 = vsel %vm56, %v37, 0
  %v100 = vsel %vm56, %v38, 0
  %v103 = vsel %vm56, %v39, 0
  %v106 = vsel %vm56, %v40, 0
  %v109 = vsel %vm56, %v41, 0
  %111 = vmatpush.xpose.msra.mxu0 %v109
  %112 = vmatpush.xpose.msra.mxu0 %v106
  %113 = vmatpush.xpose.msra.mxu0 %v103
  %114 = vmatpush.xpose.msra.mxu0 %v100
  %115 = vmatpush.xpose.msra.mxu0 %v97
  %116 = vmatpush.xpose.msra.mxu0 %v94
  %117 = vmatpush.xpose.msra.mxu0 %v91
  %118 = vmatpush.xpose.msra.mxu0 %v88
  %119 = vmatpush.xpose.msra.mxu0 %v85
  %120 = vmatpush.xpose.msra.mxu0 %v82
  %121 = vmatpush.xpose.msra.mxu0 %v79
  %122 = vmatpush.xpose.msra.mxu0 %v76
  %123 = vmatpush.xpose.msra.mxu0 %v73
  %124 = vmatpush.xpose.msra.mxu0 %v70
  %125 = vmatpush.xpose.msra.mxu0 %v67
  %126 = vmatpush.xpose.msra.mxu0 %v64
  %127 = vmatmul.f32.gmra.mxu0 %v58
  %v128 = vpop.f32.mrf.mxu0
  %v129 = vadd.f32 %v49, %v128
  %130 = vmatmul.f32.gmra.mxu0 %v61
  %v131 = vpop.f32.mrf.mxu0
  %v132 = vadd.f32 %v54, %v131
  %133 = vdwg.mxu0
  %v134 = vmax.f32 %v129, 0.0
  %v135 = vmax.f32 %v132, 0.0
  %v136 = vld [vmem:[%s2] sm:$0xff]
  %v137 = vld [vmem:[%s2 + $0x8] sm:$0xff]
  %v138 = vld [vmem:[%s3] sm:$0xff]
  %v139 = vld [vmem:[%s3 + $0x8] sm:$0xff]
  %141 = vset.pattern.permute.xlu0 0
  %142 = vperm.xlu0 %141, %v138
  %v143 = vpop.permute.xlu0 %142
  %146 = vset.pattern.permute.xlu0 0
  %147 = vperm.xlu0 %146, %v139
  %v148 = vpop.permute.xlu0 %147
  %vm150 = vcmask 130048
  %v152 = vsel %vm150, %v136, 0
  %v155 = vsel %vm150, %v137, 0
  %157 = vmatpush.msra.mxu0 0.0
  %158 = vmatpush.msra.mxu0 0.0
  %159 = vmatpush.msra.mxu0 0.0
  %160 = vmatpush.msra.mxu0 0.0
  %161 = vmatpush.msra.mxu0 0.0
  %162 = vmatpush.msra.mxu0 0.0
  %163 = vmatpush.msra.mxu0 0.0
  %164 = vmatpush.msra.mxu0 0.0
  %165 = vmatpush.msra.mxu0 0.0
  %166 = vmatpush.msra.mxu0 0.0
  %167 = vmatpush.msra.mxu0 0.0
  %168 = vmatpush.msra.mxu0 0.0
  %169 = vmatpush.msra.mxu0 0.0
  %170 = vmatpush.msra.mxu0 0.0
  %171 = vmatpush.msra.mxu0 %v135
  %172 = vmatpush.msra.mxu0 %v134
  %173 = vmatmul.f32.gmra.mxu0 %v152
  %v174 = vpop.f32.mrf.mxu0
  %v175 = vadd.f32 %v143, %v174
  %176 = vmatmul.f32.gmra.mxu0 %v155
  %v177 = vpop.f32.mrf.mxu0
  %v178 = vadd.f32 %v148, %v177
  %179 = vdwg.mxu0
  %v180 = vmax.f32 %v175, 0.0
  %v181 = vmax.f32 %v178, 0.0
  %v182 = vld [vmem:[%s4] sm:$0x3]
  %v183 = vld [vmem:[%s5] sm:$0x3]
  %185 = vset.pattern.permute.xlu0 0
  %186 = vperm.xlu0 %185, %v183
  %v187 = vpop.permute.xlu0 %186
  %v190 = vsel %vm150, %v182, 0
  %192 = vmatpush.msra.mxu0 0.0
  %193 = vmatpush.msra.mxu0 0.0
  %194 = vmatpush.msra.mxu0 0.0
  %195 = vmatpush.msra.mxu0 0.0
  %196 = vmatpush.msra.mxu0 0.0
  %197 = vmatpush.msra.mxu0 0.0
  %198 = vmatpush.msra.mxu0 0.0
  %199 = vmatpush.msra.mxu0 0.0
  %200 = vmatpush.msra.mxu0 0.0
  %201 = vmatpush.msra.mxu0 0.0
  %202 = vmatpush.msra.mxu0 0.0
  %203 = vmatpush.msra.mxu0 0.0
  %204 = vmatpush.msra.mxu0 0.0
  %205 = vmatpush.msra.mxu0 0.0
  %206 = vmatpush.msra.mxu0 %v181
  %207 = vmatpush.msra.mxu0 %v180
  %208 = vmatmul.f32.gmra.mxu0 %v190
  %v209 = vpop.f32.mrf.mxu0
  %v210 = vadd.f32 %v187, %v209
  %211 = vdwg.mxu0
  %212 = vst [vmem:[%s7] sm:$0x3] %v210
  // Predicated region
  $region30: #{_qnet_pallas_impl.1} parent=0 // pred_check
    _
  $region31: #{_qnet_pallas_impl.1} parent=0 // pred_check_branch
    %214 = sbr.rel (0) target = $region33
  $region32: #{_qnet_pallas_impl.1} parent=0 // pred_region
    _
  $region33: #{_qnet_pallas_impl.1} parent=0 // pred_fallthru
    _
  // Predicated region
  $region34: #{_qnet_pallas_impl.1} parent=0 // pred_check
    _
  $region35: #{_qnet_pallas_impl.1} parent=0 // pred_check_branch
    %216 = sbr.rel (0) target = $region37
  $region36: #{_qnet_pallas_impl.1} parent=0 // pred_region
    _
  $region37: #{_qnet_pallas_impl.1} parent=0 // pred_fallthru
    _

</llo_original>
